<compile_context>
chip_gen: v7x
topology: tpu7x:2x2x1
jax: 0.10.0
libtpu: 0.0.40
codegen_flags: <defaults>
</compile_context>

<pallas_src>
import jax
import jax.numpy as jnp
from jax import lax
from jax.experimental import pallas as pl
from jax.experimental.pallas import tpu as pltpu

# Model hyperparameters (from the PyTorch module)
VOCAB_SIZE = 27
EMBEDDING_DIM = 16
HIDDEN_DIM = 32
OUTPUT_DIM = 8   # output_dim passed to RNNClassifier (position classes)

# Example input sizes
BATCH = 2
SEQ_LEN = 8


def rnn_classifier_kernel(tok_ref,   # (T*B, 1) int32 token ids, time-major flat (i = t*B + b)
                          emb_ref,   # (V, E) embedding table
                          w_ih_ref,  # (E, H)  = PyTorch weight_ih_l0.T
                          w_hh_ref,  # (H, H)  = PyTorch weight_hh_l0.T
                          b_ih_ref,  # (1, H)
                          b_hh_ref,  # (1, H)
                          w_fc_ref,  # (H, O)  = PyTorch fc.weight.T
                          b_fc_ref,  # (1, O)
                          out_ref):  # (B, O)
    TB = tok_ref.shape[0]
    V, E = emb_ref.shape
    H = w_hh_ref.shape[0]
    B = out_ref.shape[0]
    T = TB // B

    # ---- Fused embedding lookup: one-hot matmul against the (tiny) table. ----
    tok = tok_ref[...]                                            # (T*B, 1) int32
    vocab_iota = lax.broadcasted_iota(jnp.int32, (TB, V), 1)      # (T*B, V)
    onehot = (vocab_iota == tok).astype(jnp.float32)              # (T*B, V)
    embedded = jnp.dot(onehot, emb_ref[...],
                       preferred_element_type=jnp.float32)        # (T*B, E)

    # ---- Hoisted input projection + combined RNN bias (one matmul). ----
    bias = b_ih_ref[...] + b_hh_ref[...]                          # (1, H)
    x_proj = jnp.dot(embedded, w_ih_ref[...],
                     preferred_element_type=jnp.float32) + bias   # (T*B, H)
    x_proj = x_proj.reshape(T, B, H)                              # time-major

    # ---- Recurrence: h_t = tanh(x_proj[t] + h_{t-1} @ W_hh), h carried in vregs. ----
    w_hh = w_hh_ref[...]                                          # hoisted load
    h = jnp.zeros((B, H), jnp.float32)                            # h_0 = 0 (PyTorch default)
    for t in range(T):                                            # fully unrolled (T static)
        h = jnp.tanh(x_proj[t] +
                     jnp.dot(h, w_hh, preferred_element_type=jnp.float32))

    # ---- Classifier head on the final hidden state: fc(hidden.squeeze(0)). ----
    out_ref[...] = (jnp.dot(h, w_fc_ref[...],
                            preferred_element_type=jnp.float32) + b_fc_ref[...])


def rnn_classifier_forward(x_tokens, params):
    """x_tokens: int32 (B, T).  Returns float32 (B, OUTPUT_DIM)."""
    emb_table, w_ih, w_hh, b_ih, b_hh, w_fc, b_fc = params
    B, T = x_tokens.shape
    O = w_fc.shape[1]

    # Tiny (T*B = 16 int32, 64 bytes) layout glue: time-major token column.
    # The heavy embedded activations are produced and consumed inside the kernel.
    tok_tm = x_tokens.T.reshape(T * B, 1).astype(jnp.int32)

    vmem = pl.BlockSpec(memory_space=pltpu.MemorySpace.VMEM)
    return pl.pallas_call(
        rnn_classifier_kernel,
        out_shape=jax.ShapeDtypeStruct((B, O), jnp.float32),
        in_specs=[vmem] * 8,
        out_specs=vmem,
    )(tok_tm, emb_table, w_ih, w_hh, b_ih, b_hh, w_fc, b_fc)


def init_params(key):
    """Deterministic parameter init mirroring the PyTorch module's shapes."""
    k_emb, k_ih, k_hh, k_bih, k_bhh, k_fc, k_bfc = jax.random.split(key, 7)
    bound = 1.0 / jnp.sqrt(HIDDEN_DIM)
    emb_table = jax.random.normal(k_emb, (VOCAB_SIZE, EMBEDDING_DIM), jnp.float32)
    w_ih = jax.random.uniform(k_ih, (EMBEDDING_DIM, HIDDEN_DIM), jnp.float32, -bound, bound)
    w_hh = jax.random.uniform(k_hh, (HIDDEN_DIM, HIDDEN_DIM), jnp.float32, -bound, bound)
    b_ih = jax.random.uniform(k_bih, (1, HIDDEN_DIM), jnp.float32, -bound, bound)
    b_hh = jax.random.uniform(k_bhh, (1, HIDDEN_DIM), jnp.float32, -bound, bound)
    w_fc = jax.random.uniform(k_fc, (HIDDEN_DIM, OUTPUT_DIM), jnp.float32, -bound, bound)
    b_fc = jax.random.uniform(k_bfc, (1, OUTPUT_DIM), jnp.float32, -bound, bound)
    return emb_table, w_ih, w_hh, b_ih, b_hh, w_fc, b_fc


def reference_forward(x_tokens, params):
    """Pure-JAX reference of the same forward pass for correctness checking."""
    emb_table, w_ih, w_hh, b_ih, b_hh, w_fc, b_fc = params
    embedded = jnp.take(emb_table, x_tokens, axis=0)   # (B, T, E)
    B, T, E = embedded.shape
    h = jnp.zeros((B, HIDDEN_DIM), jnp.float32)
    for t in range(T):
        h = jnp.tanh(embedded[:, t, :] @ w_ih + h @ w_hh + b_ih + b_hh)
    return h @ w_fc + b_fc


if __name__ == "__main__":
    key = jax.random.PRNGKey(0)
    k_params, k_x = jax.random.split(key)
    params = init_params(k_params)
    x = jax.random.randint(k_x, (BATCH, SEQ_LEN), 0, VOCAB_SIZE, dtype=jnp.int32)

    forward = jax.jit(rnn_classifier_forward)
    out = forward(x, params)
    out = jax.block_until_ready(out)

    ref = reference_forward(x, params)
    assert out.shape == (BATCH, OUTPUT_DIM)
    assert jnp.allclose(out, ref, atol=1e-5, rtol=1e-5)

    print("KERNEL_OK")
</pallas_src>

<mosaic_0001>
module attributes {stable_mosaic.version = 11 : i64} {
  func.func @rnn_classifier_kernel(%arg0: memref<16x1xi32, #tpu.memory_space<vmem>>, %arg1: memref<27x16xf32, #tpu.memory_space<vmem>>, %arg2: memref<16x32xf32, #tpu.memory_space<vmem>>, %arg3: memref<32x32xf32, #tpu.memory_space<vmem>>, %arg4: memref<1x32xf32, #tpu.memory_space<vmem>>, %arg5: memref<1x32xf32, #tpu.memory_space<vmem>>, %arg6: memref<32x8xf32, #tpu.memory_space<vmem>>, %arg7: memref<1x8xf32, #tpu.memory_space<vmem>>, %arg8: memref<2x8xf32, #tpu.memory_space<vmem>>) attributes {dimension_semantics = [], scalar_prefetch = 0 : i64, scratch_operands = 0 : i64, tpu.core_type = #tpu.core_type<tc>} {
    %c0 = arith.constant 0 : index
    %c0_0 = arith.constant 0 : index
    %0 = vector.load %arg0[%c0, %c0_0] : memref<16x1xi32, #tpu.memory_space<vmem>>, vector<16x1xi32>
    %1 = tpu.iota {dimensions = array<i32: 1>} : vector<16x27xi32>
    %2 = vector.broadcast %0 : vector<16x1xi32> to vector<16x27xi32>
    %3 = arith.cmpi eq, %1, %2 : vector<16x27xi32>
    %4 = arith.extui %3 : vector<16x27xi1> to vector<16x27xi32>
    %5 = arith.sitofp %4 : vector<16x27xi32> to vector<16x27xf32>
    %c0_1 = arith.constant 0 : index
    %c0_2 = arith.constant 0 : index
    %6 = vector.load %arg1[%c0_1, %c0_2] : memref<27x16xf32, #tpu.memory_space<vmem>>, vector<27x16xf32>
    %cst = arith.constant dense<0.000000e+00> : vector<16x16xf32>
    %7 = tpu.matmul %5, %6, %cst {dimension_numbers = #tpu.dot_dimension_numbers<[1], [0], [0], [1], [0, 0, 1, 1], [], []>} : vector<16x27xf32>, vector<27x16xf32>, vector<16x16xf32> -> vector<16x16xf32>
    %c0_3 = arith.constant 0 : index
    %c0_4 = arith.constant 0 : index
    %8 = vector.load %arg4[%c0_3, %c0_4] : memref<1x32xf32, #tpu.memory_space<vmem>>, vector<1x32xf32>
    %c0_5 = arith.constant 0 : index
    %c0_6 = arith.constant 0 : index
    %9 = vector.load %arg5[%c0_5, %c0_6] : memref<1x32xf32, #tpu.memory_space<vmem>>, vector<1x32xf32>
    %10 = arith.addf %8, %9 : vector<1x32xf32>
    %c0_7 = arith.constant 0 : index
    %c0_8 = arith.constant 0 : index
    %11 = vector.load %arg2[%c0_7, %c0_8] : memref<16x32xf32, #tpu.memory_space<vmem>>, vector<16x32xf32>
    %cst_9 = arith.constant dense<0.000000e+00> : vector<16x32xf32>
    %12 = tpu.matmul %7, %11, %cst_9 {dimension_numbers = #tpu.dot_dimension_numbers<[1], [0], [0], [1], [0, 0, 1, 1], [], []>} : vector<16x16xf32>, vector<16x32xf32>, vector<16x32xf32> -> vector<16x32xf32>
    %13 = vector.broadcast %10 : vector<1x32xf32> to vector<16x32xf32>
    %14 = arith.addf %12, %13 : vector<16x32xf32>
    %15 = vector.shape_cast %14 : vector<16x32xf32> to vector<8x2x32xf32>
    %c0_10 = arith.constant 0 : index
    %c0_11 = arith.constant 0 : index
    %16 = vector.load %arg3[%c0_10, %c0_11] : memref<32x32xf32, #tpu.memory_space<vmem>>, vector<32x32xf32>
    %cst_12 = arith.constant 0.000000e+00 : f32
    %17 = vector.broadcast %cst_12 : f32 to vector<2x32xf32>
    %18 = vector.extract_strided_slice %15 {offsets = [0, 0, 0], sizes = [1, 2, 32], strides = [1, 1, 1]} : vector<8x2x32xf32> to vector<1x2x32xf32>
    %19 = vector.shape_cast %18 : vector<1x2x32xf32> to vector<2x32xf32>
    %cst_13 = arith.constant dense<0.000000e+00> : vector<2x32xf32>
    %20 = tpu.matmul %17, %16, %cst_13 {dimension_numbers = #tpu.dot_dimension_numbers<[1], [0], [0], [1], [0, 0, 1, 1], [], []>} : vector<2x32xf32>, vector<32x32xf32>, vector<2x32xf32> -> vector<2x32xf32>
    %21 = arith.addf %19, %20 : vector<2x32xf32>
    %22 = math.tanh %21 : vector<2x32xf32>
    %23 = vector.extract_strided_slice %15 {offsets = [1, 0, 0], sizes = [1, 2, 32], strides = [1, 1, 1]} : vector<8x2x32xf32> to vector<1x2x32xf32>
    %24 = vector.shape_cast %23 : vector<1x2x32xf32> to vector<2x32xf32>
    %cst_14 = arith.constant dense<0.000000e+00> : vector<2x32xf32>
    %25 = tpu.matmul %22, %16, %cst_14 {dimension_numbers = #tpu.dot_dimension_numbers<[1], [0], [0], [1], [0, 0, 1, 1], [], []>} : vector<2x32xf32>, vector<32x32xf32>, vector<2x32xf32> -> vector<2x32xf32>
    %26 = arith.addf %24, %25 : vector<2x32xf32>
    %27 = math.tanh %26 : vector<2x32xf32>
    %28 = vector.extract_strided_slice %15 {offsets = [2, 0, 0], sizes = [1, 2, 32], strides = [1, 1, 1]} : vector<8x2x32xf32> to vector<1x2x32xf32>
    %29 = vector.shape_cast %28 : vector<1x2x32xf32> to vector<2x32xf32>
    %cst_15 = arith.constant dense<0.000000e+00> : vector<2x32xf32>
    %30 = tpu.matmul %27, %16, %cst_15 {dimension_numbers = #tpu.dot_dimension_numbers<[1], [0], [0], [1], [0, 0, 1, 1], [], []>} : vector<2x32xf32>, vector<32x32xf32>, vector<2x32xf32> -> vector<2x32xf32>
    %31 = arith.addf %29, %30 : vector<2x32xf32>
    %32 = math.tanh %31 : vector<2x32xf32>
    %33 = vector.extract_strided_slice %15 {offsets = [3, 0, 0], sizes = [1, 2, 32], strides = [1, 1, 1]} : vector<8x2x32xf32> to vector<1x2x32xf32>
    %34 = vector.shape_cast %33 : vector<1x2x32xf32> to vector<2x32xf32>
    %cst_16 = arith.constant dense<0.000000e+00> : vector<2x32xf32>
    %35 = tpu.matmul %32, %16, %cst_16 {dimension_numbers = #tpu.dot_dimension_numbers<[1], [0], [0], [1], [0, 0, 1, 1], [], []>} : vector<2x32xf32>, vector<32x32xf32>, vector<2x32xf32> -> vector<2x32xf32>
    %36 = arith.addf %34, %35 : vector<2x32xf32>
    %37 = math.tanh %36 : vector<2x32xf32>
    %38 = vector.extract_strided_slice %15 {offsets = [4, 0, 0], sizes = [1, 2, 32], strides = [1, 1, 1]} : vector<8x2x32xf32> to vector<1x2x32xf32>
    %39 = vector.shape_cast %38 : vector<1x2x32xf32> to vector<2x32xf32>
    %cst_17 = arith.constant dense<0.000000e+00> : vector<2x32xf32>
    %40 = tpu.matmul %37, %16, %cst_17 {dimension_numbers = #tpu.dot_dimension_numbers<[1], [0], [0], [1], [0, 0, 1, 1], [], []>} : vector<2x32xf32>, vector<32x32xf32>, vector<2x32xf32> -> vector<2x32xf32>
    %41 = arith.addf %39, %40 : vector<2x32xf32>
    %42 = math.tanh %41 : vector<2x32xf32>
    %43 = vector.extract_strided_slice %15 {offsets = [5, 0, 0], sizes = [1, 2, 32], strides = [1, 1, 1]} : vector<8x2x32xf32> to vector<1x2x32xf32>
    %44 = vector.shape_cast %43 : vector<1x2x32xf32> to vector<2x32xf32>
    %cst_18 = arith.constant dense<0.000000e+00> : vector<2x32xf32>
    %45 = tpu.matmul %42, %16, %cst_18 {dimension_numbers = #tpu.dot_dimension_numbers<[1], [0], [0], [1], [0, 0, 1, 1], [], []>} : vector<2x32xf32>, vector<32x32xf32>, vector<2x32xf32> -> vector<2x32xf32>
    %46 = arith.addf %44, %45 : vector<2x32xf32>
    %47 = math.tanh %46 : vector<2x32xf32>
    %48 = vector.extract_strided_slice %15 {offsets = [6, 0, 0], sizes = [1, 2, 32], strides = [1, 1, 1]} : vector<8x2x32xf32> to vector<1x2x32xf32>
    %49 = vector.shape_cast %48 : vector<1x2x32xf32> to vector<2x32xf32>
    %cst_19 = arith.constant dense<0.000000e+00> : vector<2x32xf32>
    %50 = tpu.matmul %47, %16, %cst_19 {dimension_numbers = #tpu.dot_dimension_numbers<[1], [0], [0], [1], [0, 0, 1, 1], [], []>} : vector<2x32xf32>, vector<32x32xf32>, vector<2x32xf32> -> vector<2x32xf32>
    %51 = arith.addf %49, %50 : vector<2x32xf32>
    %52 = math.tanh %51 : vector<2x32xf32>
    %53 = vector.extract_strided_slice %15 {offsets = [7, 0, 0], sizes = [1, 2, 32], strides = [1, 1, 1]} : vector<8x2x32xf32> to vector<1x2x32xf32>
    %54 = vector.shape_cast %53 : vector<1x2x32xf32> to vector<2x32xf32>
    %cst_20 = arith.constant dense<0.000000e+00> : vector<2x32xf32>
    %55 = tpu.matmul %52, %16, %cst_20 {dimension_numbers = #tpu.dot_dimension_numbers<[1], [0], [0], [1], [0, 0, 1, 1], [], []>} : vector<2x32xf32>, vector<32x32xf32>, vector<2x32xf32> -> vector<2x32xf32>
    %56 = arith.addf %54, %55 : vector<2x32xf32>
    %57 = math.tanh %56 : vector<2x32xf32>
    %c0_21 = arith.constant 0 : index
    %c0_22 = arith.constant 0 : index
    %58 = vector.load %arg6[%c0_21, %c0_22] : memref<32x8xf32, #tpu.memory_space<vmem>>, vector<32x8xf32>
    %cst_23 = arith.constant dense<0.000000e+00> : vector<2x8xf32>
    %59 = tpu.matmul %57, %58, %cst_23 {dimension_numbers = #tpu.dot_dimension_numbers<[1], [0], [0], [1], [0, 0, 1, 1], [], []>} : vector<2x32xf32>, vector<32x8xf32>, vector<2x8xf32> -> vector<2x8xf32>
    %c0_24 = arith.constant 0 : index
    %c0_25 = arith.constant 0 : index
    %60 = vector.load %arg7[%c0_24, %c0_25] : memref<1x8xf32, #tpu.memory_space<vmem>>, vector<1x8xf32>
    %61 = vector.broadcast %60 : vector<1x8xf32> to vector<2x8xf32>
    %62 = arith.addf %59, %61 : vector<2x8xf32>
    %c0_26 = arith.constant 0 : index
    %c0_27 = arith.constant 0 : index
    %63 = vector.load %arg8[%c0_26, %c0_27] : memref<2x8xf32, #tpu.memory_space<vmem>>, vector<2x8xf32>
    tpu.vector_store %arg8[%c0_26, %c0_27], %62 {strides = array<i32>} : memref<2x8xf32, #tpu.memory_space<vmem>>, vector<2x8xf32>,
    return
  }
}

</mosaic_0001>

<llo_original>
// kernel: rnn_classifier_forward.1
$region0: #{rnn_classifier_forward.1}
  #allocation0 [shape = 'u32[]', space=smem, size = 0x4, offset = 0x4, fixed_abs, tag = 'smem constant byte address 0x4 - core index']
  #allocation1 [shape = 'u32[144,128]{1,0:T(1,128)}', space=vmem, size = 0x12000, scoped, tag = 'internal scratch']
  %s0 = inlined_call_operand.vmem [shape: s32[16,1], index: 0, kind: input, shape index: {}]
  %s1 = inlined_call_operand.vmem [shape: f32[27,16], index: 1, kind: input, shape index: {}]
  %s2 = inlined_call_operand.vmem [shape: f32[16,32], index: 2, kind: input, shape index: {}]
  %s3 = inlined_call_operand.vmem [shape: f32[32,32], index: 3, kind: input, shape index: {}]
  %s4 = inlined_call_operand.vmem [shape: f32[1,32], index: 4, kind: input, shape index: {}]
  %s5 = inlined_call_operand.vmem [shape: f32[1,32], index: 5, kind: input, shape index: {}]
  %s6 = inlined_call_operand.vmem [shape: f32[32,8], index: 6, kind: input, shape index: {}]
  %s7 = inlined_call_operand.vmem [shape: f32[1,8], index: 7, kind: input, shape index: {}]
  %s8 = inlined_call_operand.hbm [shape: f32[2,8], index: 8, kind: output, shape index: {}]
  %s9 = sld [smem:[#allocation0]]
  $region42: #{rnn_classifier_forward.1} parent=0
    _
  %s11 = ssub.s32 1, %s9
  %s12 = scalar_select 0, %s11, %s9
  $region1: #{rnn_classifier_forward.1} parent=0
    #allocation2 [shape = 'u8[1024]{0}', space=vmem, size = 0x400, scoped, tag = 'output window, operand 0, single buffered']
    #allocation3 [shape = 's32[1]{0}', space=sflag, size = 0x4, scoped, tag = 'scoped memory for rnn_classifier_forward.1']
    %13 = vsyncpa [#allocation3], 0
    // Predicated region
    $region2: #{rnn_classifier_forward.1} parent=1 // pred_check
      _
    $region3: #{rnn_classifier_forward.1} parent=1 // pred_check_branch
      %15 = sbr.rel (0) target = $region5
    $region4: #{rnn_classifier_forward.1} parent=1 // pred_region
      _
    $region5: #{rnn_classifier_forward.1} parent=1 // pred_fallthru
      _
    // Predicated region
    $region6: #{rnn_classifier_forward.1} parent=1 // pred_check
      _
    $region7: #{rnn_classifier_forward.1} parent=1 // pred_check_branch
      %17 = sbr.rel (0) target = $region9
    $region8: #{rnn_classifier_forward.1} parent=1 // pred_region
      _
    $region9: #{rnn_classifier_forward.1} parent=1 // pred_fallthru
      _
    // Predicated region
    $region10: #{rnn_classifier_forward.1} parent=1 // pred_check
      _
    $region11: #{rnn_classifier_forward.1} parent=1 // pred_check_branch
      %19 = sbr.rel (0) target = $region13
    $region12: #{rnn_classifier_forward.1} parent=1 // pred_region
      _
    $region13: #{rnn_classifier_forward.1} parent=1 // pred_fallthru
      _
    // Predicated region
    $region14: #{rnn_classifier_forward.1} parent=1 // pred_check
      _
    $region15: #{rnn_classifier_forward.1} parent=1 // pred_check_branch
      %21 = sbr.rel (0) target = $region17
    $region16: #{rnn_classifier_forward.1} parent=1 // pred_region
      _
    $region17: #{rnn_classifier_forward.1} parent=1 // pred_fallthru
      _
    // Predicated region
    $region18: #{rnn_classifier_forward.1} parent=1 // pred_check
      _
    $region19: #{rnn_classifier_forward.1} parent=1 // pred_check_branch
      %23 = sbr.rel (0) target = $region21
    $region20: #{rnn_classifier_forward.1} parent=1 // pred_region
      _
    $region21: #{rnn_classifier_forward.1} parent=1 // pred_fallthru
      _
    // Predicated region
    $region22: #{rnn_classifier_forward.1} parent=1 // pred_check
      _
    $region23: #{rnn_classifier_forward.1} parent=1 // pred_check_branch
      %25 = sbr.rel (0) target = $region25
    $region24: #{rnn_classifier_forward.1} parent=1 // pred_region
      _
    $region25: #{rnn_classifier_forward.1} parent=1 // pred_fallthru
      _
    // Predicated region
    $region26: #{rnn_classifier_forward.1} parent=1 // pred_check
      _
    $region27: #{rnn_classifier_forward.1} parent=1 // pred_check_branch
      %27 = sbr.rel (0) target = $region29
    $region28: #{rnn_classifier_forward.1} parent=1 // pred_region
      _
    $region29: #{rnn_classifier_forward.1} parent=1 // pred_fallthru
      _
    // Predicated region
    $region30: #{rnn_classifier_forward.1} parent=1 // pred_check
      _
    $region31: #{rnn_classifier_forward.1} parent=1 // pred_check_branch
      %29 = sbr.rel (0) target = $region33
    $region32: #{rnn_classifier_forward.1} parent=1 // pred_region
      _
    $region33: #{rnn_classifier_forward.1} parent=1 // pred_fallthru
      _
    %v30 = vld [vmem:[%s0] sm:$0xff]
    %v31 = vld [vmem:[%s0 + $0x8] sm:$0xff]
    %v32 = vlaneseq
    %v33 = vand.u32 %v32, 127
    %34 = vset.pattern.permute.xlu0 0
    %35 = vperm.xlu0 %34, %v30
    %v36 = vpop.permute.xlu0 %35
    %37 = vset.pattern.permute.xlu0 0
    %38 = vperm.xlu0 %37, %v31
    %v39 = vpop.permute.xlu0 %38
    %vm40 = vcmp.eq.s32.totalorder %v33, %v36
    %vm41 = vcmp.eq.s32.totalorder %v33, %v39
    %v42 = vsel %vm40, 1, 0
    %v43 = vsel %vm41, 1, 0
    %v44 = vcvt.s32.f32 %v42
    %v45 = vcvt.s32.f32 %v43
    %v46 = vld [vmem:[%s1] sm:$0xff]
    %v47 = vld [vmem:[%s1 + $0x8] sm:$0xff]
    %v48 = vld [vmem:[%s1 + $0x10] sm:$0xff]
    %v49 = vld [vmem:[%s1 + $0x18] sm:$0x7]
    %vm50 = vcmask 220160
    %v52 = vsel %vm50, %v44, 0
    %v55 = vsel %vm50, %v45, 0
    %vm57 = vcmask 1042432
    %v59 = vsel %vm57, %v49, 0
    %61 = vmatprep.subr.mxu0 0.0
    %62 = vmatpush1.msra.mxu0 %v46
    %63 = vmatprep.subr.mxu0 0.0
    %64 = vmatpush1.msra.mxu0 %v47
    %65 = vmatprep.subr.mxu0 0.0
    %66 = vmatpush1.msra.mxu0 %v48
    %67 = vmatprep.subr.mxu0 0.0
    %68 = vmatpush1.msra.mxu0 %v59
    %69 = vmatprep.subr.mxu0 0.0
    %70 = vmatpush1.msra.mxu0 0.0
    %71 = vmatprep.subr.mxu0 0.0
    %72 = vmatpush1.msra.mxu0 0.0
    %73 = vmatprep.subr.mxu0 0.0
    %74 = vmatpush1.msra.mxu0 0.0
    %75 = vmatprep.subr.mxu0 0.0
    %76 = vmatpush1.msra.mxu0 0.0
    %77 = vmatprep.subr.mxu0 0.0
    %78 = vmatpush1.msra.mxu0 0.0
    %79 = vmatprep.subr.mxu0 0.0
    %80 = vmatpush1.msra.mxu0 0.0
    %81 = vmatprep.subr.mxu0 0.0
    %82 = vmatpush1.msra.mxu0 0.0
    %83 = vmatprep.subr.mxu0 0.0
    %84 = vmatpush1.msra.mxu0 0.0
    %85 = vmatprep.subr.mxu0 0.0
    %86 = vmatpush1.msra.mxu0 0.0
    %87 = vmatprep.subr.mxu0 0.0
    %88 = vmatpush1.msra.mxu0 0.0
    %89 = vmatprep.subr.mxu0 0.0
    %90 = vmatpush1.msra.mxu0 0.0
    %91 = vmatprep.subr.mxu0 0.0
    %92 = vmatpush1.msra.mxu0 0.0
    %93 = vmatprep.subr.mxu0 0.0
    %94 = vmatpush1.msra.mxu0 0.0
    %95 = vmatprep.subr.mxu0 0.0
    %96 = vmatpush1.msra.mxu0 0.0
    %97 = vmatprep.subr.mxu0 0.0
    %98 = vmatpush1.msra.mxu0 0.0
    %99 = vmatprep.subr.mxu0 0.0
    %100 = vmatpush1.msra.mxu0 0.0
    %101 = vmatprep.subr.mxu0 0.0
    %102 = vmatpush1.msra.mxu0 0.0
    %103 = vmatprep.subr.mxu0 0.0
    %104 = vmatpush1.msra.mxu0 0.0
    %105 = vmatprep.subr.mxu0 0.0
    %106 = vmatpush1.msra.mxu0 0.0
    %107 = vmatprep.subr.mxu0 0.0
    %108 = vmatpush1.msra.mxu0 0.0
    %109 = vmatprep.subr.mxu0 0.0
    %110 = vmatpush1.msra.mxu0 0.0
    %111 = vmatprep.subr.mxu0 0.0
    %112 = vmatpush1.msra.mxu0 0.0
    %113 = vmatprep.subr.mxu0 0.0
    %114 = vmatpush1.msra.mxu0 0.0
    %115 = vmatprep.subr.mxu0 0.0
    %116 = vmatpush1.msra.mxu0 0.0
    %117 = vmatprep.subr.mxu0 0.0
    %118 = vmatpush1.msra.mxu0 0.0
    %119 = vmatprep.subr.mxu0 0.0
    %120 = vmatpush1.msra.mxu0 0.0
    %121 = vmatprep.subr.mxu0 0.0
    %122 = vmatpush1.msra.mxu0 0.0
    %123 = vmatprep.subr.mxu0 0.0
    %124 = vmatpush1.msra.mxu0 0.0
    %125 = vmatprep.mubr.f32.mxu0 0.0
    %126 = vmatmul.mubr.f32.gmra.mrb[0].mxu0 %v52
    %v127 = vpop.f32.mrb[0].mxu0
    %v128 = vadd.f32 0.0, %v127
    %v129 = vpop.f32.mrb[0].mxu0
    %130 = vmatprep.mubr.f32.mxu0 0.0
    %131 = vmatmul.mubr.f32.gmra.mrb[0].mxu0 %v55
    %v132 = vpop.f32.mrb[0].mxu0
    %v133 = vadd.f32 0.0, %v132
    %v134 = vpop.f32.mrb[0].mxu0
    %135 = vdwg.mxu0
    %v136 = vld [vmem:[%s4] sm:$0x1]
    %v137 = vld [vmem:[%s5] sm:$0x1]
    %v138 = vadd.f32 %v136, %v137
    %v139 = vld [vmem:[%s2] sm:$0xff]
    %v140 = vld [vmem:[%s2 + $0x8] sm:$0xff]
    %v142 = vlaneseq
    %v143 = vshrl.u32 %v142, 7
    %v144 = vsub.s32 0, %v143
    %v145 = vrot.slane %v138, %v144
    %vm147 = vcmask 130048
    %v149 = vsel %vm147, %v128, 0
    %v152 = vsel %vm147, %v133, 0
    %154 = vmatprep.subr.mxu0 0.0
    %155 = vmatpush1.msra.mxu0 %v139
    %156 = vmatprep.subr.mxu0 0.0
    %157 = vmatpush1.msra.mxu0 %v140
    %158 = vmatprep.subr.mxu0 0.0
    %159 = vmatpush1.msra.mxu0 0.0
    %160 = vmatprep.subr.mxu0 0.0
    %161 = vmatpush1.msra.mxu0 0.0
    %162 = vmatprep.subr.mxu0 0.0
    %163 = vmatpush1.msra.mxu0 0.0
    %164 = vmatprep.subr.mxu0 0.0
    %165 = vmatpush1.msra.mxu0 0.0
    %166 = vmatprep.subr.mxu0 0.0
    %167 = vmatpush1.msra.mxu0 0.0
    %168 = vmatprep.subr.mxu0 0.0
    %169 = vmatpush1.msra.mxu0 0.0
    %170 = vmatprep.subr.mxu0 0.0
    %171 = vmatpush1.msra.mxu0 0.0
    %172 = vmatprep.subr.mxu0 0.0
    %173 = vmatpush1.msra.mxu0 0.0
    %174 = vmatprep.subr.mxu0 0.0
    %175 = vmatpush1.msra.mxu0 0.0
    %176 = vmatprep.subr.mxu0 0.0
    %177 = vmatpush1.msra.mxu0 0.0
    %178 = vmatprep.subr.mxu0 0.0
    %179 = vmatpush1.msra.mxu0 0.0
    %180 = vmatprep.subr.mxu0 0.0
    %181 = vmatpush1.msra.mxu0 0.0
    %182 = vmatprep.subr.mxu0 0.0
    %183 = vmatpush1.msra.mxu0 0.0
    %184 = vmatprep.subr.mxu0 0.0
    %185 = vmatpush1.msra.mxu0 0.0
    %186 = vmatprep.subr.mxu0 0.0
    %187 = vmatpush1.msra.mxu0 0.0
    %188 = vmatprep.subr.mxu0 0.0
    %189 = vmatpush1.msra.mxu0 0.0
    %190 = vmatprep.subr.mxu0 0.0
    %191 = vmatpush1.msra.mxu0 0.0
    %192 = vmatprep.subr.mxu0 0.0
    %193 = vmatpush1.msra.mxu0 0.0
    %194 = vmatprep.subr.mxu0 0.0
    %195 = vmatpush1.msra.mxu0 0.0
    %196 = vmatprep.subr.mxu0 0.0
    %197 = vmatpush1.msra.mxu0 0.0
    %198 = vmatprep.subr.mxu0 0.0
    %199 = vmatpush1.msra.mxu0 0.0
    %200 = vmatprep.subr.mxu0 0.0
    %201 = vmatpush1.msra.mxu0 0.0
    %202 = vmatprep.subr.mxu0 0.0
    %203 = vmatpush1.msra.mxu0 0.0
    %204 = vmatprep.subr.mxu0 0.0
    %205 = vmatpush1.msra.mxu0 0.0
    %206 = vmatprep.subr.mxu0 0.0
    %207 = vmatpush1.msra.mxu0 0.0
    %208 = vmatprep.subr.mxu0 0.0
    %209 = vmatpush1.msra.mxu0 0.0
    %210 = vmatprep.subr.mxu0 0.0
    %211 = vmatpush1.msra.mxu0 0.0
    %212 = vmatprep.subr.mxu0 0.0
    %213 = vmatpush1.msra.mxu0 0.0
    %214 = vmatprep.subr.mxu0 0.0
    %215 = vmatpush1.msra.mxu0 0.0
    %216 = vmatprep.subr.mxu0 0.0
    %217 = vmatpush1.msra.mxu0 0.0
    %218 = vmatprep.mubr.f32.mxu0 0.0
    %219 = vmatmul.mubr.f32.gmra.mrb[0].mxu0 %v149
    %v220 = vpop.f32.mrb[0].mxu0
    %v221 = vadd.f32 %v145, %v220
    %v222 = vpop.f32.mrb[0].mxu0
    %223 = vmatprep.mubr.f32.mxu0 0.0
    %224 = vmatmul.mubr.f32.gmra.mrb[0].mxu0 %v152
    %v225 = vpop.f32.mrb[0].mxu0
    %v226 = vadd.f32 %v145, %v225
    %v227 = vpop.f32.mrb[0].mxu0
    %228 = vdwg.mxu0
    %v231 = vcombine.high %v221, %v221
    %v233 = vunpack.c.l.s4 1983009808
    %v234 = vunpack.c.0.s8 %v233
    %v235 = vlaneseq
    %v236 = vshrl.u32 %v235, 7
    %v237 = vsub.s32 %v234, %v236
    %v238 = vrot.slane %v221, %v237
    %v240 = vunpack.c.l.s4 1983009808
    %v241 = vunpack.c.0.s8 %v240
    %v242 = vlaneseq
    %v243 = vshrl.u32 %v242, 7
    %v244 = vsub.s32 %v241, %v243
    %v245 = vrot.slane %v231, %v244
    %v246 = vcombine.high %v238, %v238
    %v247 = vcombine.high %v245, %v245
    %v248 = vcombine.high %v226, %v226
    %v250 = vunpack.c.l.s4 1983009808
    %v251 = vunpack.c.0.s8 %v250
    %v252 = vlaneseq
    %v253 = vshrl.u32 %v252, 7
    %v254 = vsub.s32 %v251, %v253
    %v255 = vrot.slane %v226, %v254
    %v257 = vunpack.c.l.s4 1983009808
    %v258 = vunpack.c.0.s8 %v257
    %v259 = vlaneseq
    %v260 = vshrl.u32 %v259, 7
    %v261 = vsub.s32 %v258, %v260
    %v262 = vrot.slane %v248, %v261
    %v263 = vcombine.high %v255, %v255
    %v264 = vcombine.high %v262, %v262
    %v273 = vld [vmem:[%s3] sm:$0xff]
    %v274 = vld [vmem:[%s3 + $0x8] sm:$0xff]
    %v275 = vld [vmem:[%s3 + $0x10] sm:$0xff]
    %v276 = vld [vmem:[%s3 + $0x18] sm:$0xff]
    %vm277 = vcmask 261120
    %v279 = vsel %vm277, 0.0, 0
    %281 = vmatprep.subr.mxu0 0.0
    %282 = vmatpush1.msra.mxu0 %v273
    %283 = vmatprep.subr.mxu0 0.0
    %284 = vmatpush1.msra.mxu0 %v274
    %285 = vmatprep.subr.mxu0 0.0
    %286 = vmatpush1.msra.mxu0 %v275
    %287 = vmatprep.subr.mxu0 0.0
    %288 = vmatpush1.msra.mxu0 %v276
    %289 = vmatprep.subr.mxu0 0.0
    %290 = vmatpush1.msra.mxu0 0.0
    %291 = vmatprep.subr.mxu0 0.0
    %292 = vmatpush1.msra.mxu0 0.0
    %293 = vmatprep.subr.mxu0 0.0
    %294 = vmatpush1.msra.mxu0 0.0
    %295 = vmatprep.subr.mxu0 0.0
    %296 = vmatpush1.msra.mxu0 0.0
    %297 = vmatprep.subr.mxu0 0.0
    %298 = vmatpush1.msra.mxu0 0.0
    %299 = vmatprep.subr.mxu0 0.0
    %300 = vmatpush1.msra.mxu0 0.0
    %301 = vmatprep.subr.mxu0 0.0
    %302 = vmatpush1.msra.mxu0 0.0
    %303 = vmatprep.subr.mxu0 0.0
    %304 = vmatpush1.msra.mxu0 0.0
    %305 = vmatprep.subr.mxu0 0.0
    %306 = vmatpush1.msra.mxu0 0.0
    %307 = vmatprep.subr.mxu0 0.0
    %308 = vmatpush1.msra.mxu0 0.0
    %309 = vmatprep.subr.mxu0 0.0
    %310 = vmatpush1.msra.mxu0 0.0
    %311 = vmatprep.subr.mxu0 0.0
    %312 = vmatpush1.msra.mxu0 0.0
    %313 = vmatprep.subr.mxu0 0.0
    %314 = vmatpush1.msra.mxu0 0.0
    %315 = vmatprep.subr.mxu0 0.0
    %316 = vmatpush1.msra.mxu0 0.0
    %317 = vmatprep.subr.mxu0 0.0
    %318 = vmatpush1.msra.mxu0 0.0
    %319 = vmatprep.subr.mxu0 0.0
    %320 = vmatpush1.msra.mxu0 0.0
    %321 = vmatprep.subr.mxu0 0.0
    %322 = vmatpush1.msra.mxu0 0.0
    %323 = vmatprep.subr.mxu0 0.0
    %324 = vmatpush1.msra.mxu0 0.0
    %325 = vmatprep.subr.mxu0 0.0
    %326 = vmatpush1.msra.mxu0 0.0
    %327 = vmatprep.subr.mxu0 0.0
    %328 = vmatpush1.msra.mxu0 0.0
    %329 = vmatprep.subr.mxu0 0.0
    %330 = vmatpush1.msra.mxu0 0.0
    %331 = vmatprep.subr.mxu0 0.0
    %332 = vmatpush1.msra.mxu0 0.0
    %333 = vmatprep.subr.mxu0 0.0
    %334 = vmatpush1.msra.mxu0 0.0
    %335 = vmatprep.subr.mxu0 0.0
    %336 = vmatpush1.msra.mxu0 0.0
    %337 = vmatprep.subr.mxu0 0.0
    %338 = vmatpush1.msra.mxu0 0.0
    %339 = vmatprep.subr.mxu0 0.0
    %340 = vmatpush1.msra.mxu0 0.0
    %341 = vmatprep.subr.mxu0 0.0
    %342 = vmatpush1.msra.mxu0 0.0
    %343 = vmatprep.subr.mxu0 0.0
    %344 = vmatpush1.msra.mxu0 0.0
    %345 = vmatprep.mubr.f32.mxu0 0.0
    %346 = vmatmul.mubr.f32.gmra.mrb[0].mxu0 %v279
    %v347 = vpop.f32.mrb[0].mxu0
    %v348 = vadd.f32 0.0, %v347
    %v349 = vpop.f32.mrb[0].mxu0
    %350 = vdwg.mxu0
    %v351 = vadd.f32 %v238, %v348
    %v352 = vtanh.pop %v351
    %v354 = vsel %vm277, %v352, 0
    %356 = vmatprep.subr.mxu0 0.0
    %357 = vmatpush1.msra.mxu0 %v273
    %358 = vmatprep.subr.mxu0 0.0
    %359 = vmatpush1.msra.mxu0 %v274
    %360 = vmatprep.subr.mxu0 0.0
    %361 = vmatpush1.msra.mxu0 %v275
    %362 = vmatprep.subr.mxu0 0.0
    %363 = vmatpush1.msra.mxu0 %v276
    %364 = vmatprep.subr.mxu0 0.0
    %365 = vmatpush1.msra.mxu0 0.0
    %366 = vmatprep.subr.mxu0 0.0
    %367 = vmatpush1.msra.mxu0 0.0
    %368 = vmatprep.subr.mxu0 0.0
    %369 = vmatpush1.msra.mxu0 0.0
    %370 = vmatprep.subr.mxu0 0.0
    %371 = vmatpush1.msra.mxu0 0.0
    %372 = vmatprep.subr.mxu0 0.0
    %373 = vmatpush1.msra.mxu0 0.0
    %374 = vmatprep.subr.mxu0 0.0
    %375 = vmatpush1.msra.mxu0 0.0
    %376 = vmatprep.subr.mxu0 0.0
    %377 = vmatpush1.msra.mxu0 0.0
    %378 = vmatprep.subr.mxu0 0.0
    %379 = vmatpush1.msra.mxu0 0.0
    %380 = vmatprep.subr.mxu0 0.0
    %381 = vmatpush1.msra.mxu0 0.0
    %382 = vmatprep.subr.mxu0 0.0
    %383 = vmatpush1.msra.mxu0 0.0
    %384 = vmatprep.subr.mxu0 0.0
    %385 = vmatpush1.msra.mxu0 0.0
    %386 = vmatprep.subr.mxu0 0.0
    %387 = vmatpush1.msra.mxu0 0.0
    %388 = vmatprep.subr.mxu0 0.0
    %389 = vmatpush1.msra.mxu0 0.0
    %390 = vmatprep.subr.mxu0 0.0
    %391 = vmatpush1.msra.mxu0 0.0
    %392 = vmatprep.subr.mxu0 0.0
    %393 = vmatpush1.msra.mxu0 0.0
    %394 = vmatprep.subr.mxu0 0.0
    %395 = vmatpush1.msra.mxu0 0.0
    %396 = vmatprep.subr.mxu0 0.0
    %397 = vmatpush1.msra.mxu0 0.0
    %398 = vmatprep.subr.mxu0 0.0
    %399 = vmatpush1.msra.mxu0 0.0
    %400 = vmatprep.subr.mxu0 0.0
    %401 = vmatpush1.msra.mxu0 0.0
    %402 = vmatprep.subr.mxu0 0.0
    %403 = vmatpush1.msra.mxu0 0.0
    %404 = vmatprep.subr.mxu0 0.0
    %405 = vmatpush1.msra.mxu0 0.0
    %406 = vmatprep.subr.mxu0 0.0
    %407 = vmatpush1.msra.mxu0 0.0
    %408 = vmatprep.subr.mxu0 0.0
    %409 = vmatpush1.msra.mxu0 0.0
    %410 = vmatprep.subr.mxu0 0.0
    %411 = vmatpush1.msra.mxu0 0.0
    %412 = vmatprep.subr.mxu0 0.0
    %413 = vmatpush1.msra.mxu0 0.0
    %414 = vmatprep.subr.mxu0 0.0
    %415 = vmatpush1.msra.mxu0 0.0
    %416 = vmatprep.subr.mxu0 0.0
    %417 = vmatpush1.msra.mxu0 0.0
    %418 = vmatprep.subr.mxu0 0.0
    %419 = vmatpush1.msra.mxu0 0.0
    %420 = vmatprep.mubr.f32.mxu0 0.0
    %421 = vmatmul.mubr.f32.gmra.mrb[0].mxu0 %v354
    %v422 = vpop.f32.mrb[0].mxu0
    %v423 = vadd.f32 0.0, %v422
    %v424 = vpop.f32.mrb[0].mxu0
    %425 = vdwg.mxu0
    %v426 = vadd.f32 %v246, %v423
    %v427 = vtanh.pop %v426
    %v429 = vsel %vm277, %v427, 0
    %431 = vmatprep.subr.mxu0 0.0
    %432 = vmatpush1.msra.mxu0 %v273
    %433 = vmatprep.subr.mxu0 0.0
    %434 = vmatpush1.msra.mxu0 %v274
    %435 = vmatprep.subr.mxu0 0.0
    %436 = vmatpush1.msra.mxu0 %v275
    %437 = vmatprep.subr.mxu0 0.0
    %438 = vmatpush1.msra.mxu0 %v276
    %439 = vmatprep.subr.mxu0 0.0
    %440 = vmatpush1.msra.mxu0 0.0
    %441 = vmatprep.subr.mxu0 0.0
    %442 = vmatpush1.msra.mxu0 0.0
    %443 = vmatprep.subr.mxu0 0.0
    %444 = vmatpush1.msra.mxu0 0.0
    %445 = vmatprep.subr.mxu0 0.0
    %446 = vmatpush1.msra.mxu0 0.0
    %447 = vmatprep.subr.mxu0 0.0
    %448 = vmatpush1.msra.mxu0 0.0
    %449 = vmatprep.subr.mxu0 0.0
    %450 = vmatpush1.msra.mxu0 0.0
    %451 = vmatprep.subr.mxu0 0.0
    %452 = vmatpush1.msra.mxu0 0.0
    %453 = vmatprep.subr.mxu0 0.0
    %454 = vmatpush1.msra.mxu0 0.0
    %455 = vmatprep.subr.mxu0 0.0
    %456 = vmatpush1.msra.mxu0 0.0
    %457 = vmatprep.subr.mxu0 0.0
    %458 = vmatpush1.msra.mxu0 0.0
    %459 = vmatprep.subr.mxu0 0.0
    %460 = vmatpush1.msra.mxu0 0.0
    %461 = vmatprep.subr.mxu0 0.0
    %462 = vmatpush1.msra.mxu0 0.0
    %463 = vmatprep.subr.mxu0 0.0
    %464 = vmatpush1.msra.mxu0 0.0
    %465 = vmatprep.subr.mxu0 0.0
    %466 = vmatpush1.msra.mxu0 0.0
    %467 = vmatprep.subr.mxu0 0.0
    %468 = vmatpush1.msra.mxu0 0.0
    %469 = vmatprep.subr.mxu0 0.0
    %470 = vmatpush1.msra.mxu0 0.0
    %471 = vmatprep.subr.mxu0 0.0
    %472 = vmatpush1.msra.mxu0 0.0
    %473 = vmatprep.subr.mxu0 0.0
    %474 = vmatpush1.msra.mxu0 0.0
    %475 = vmatprep.subr.mxu0 0.0
    %476 = vmatpush1.msra.mxu0 0.0
    %477 = vmatprep.subr.mxu0 0.0
    %478 = vmatpush1.msra.mxu0 0.0
    %479 = vmatprep.subr.mxu0 0.0
    %480 = vmatpush1.msra.mxu0 0.0
    %481 = vmatprep.subr.mxu0 0.0
    %482 = vmatpush1.msra.mxu0 0.0
    %483 = vmatprep.subr.mxu0 0.0
    %484 = vmatpush1.msra.mxu0 0.0
    %485 = vmatprep.subr.mxu0 0.0
    %486 = vmatpush1.msra.mxu0 0.0
    %487 = vmatprep.subr.mxu0 0.0
    %488 = vmatpush1.msra.mxu0 0.0
    %489 = vmatprep.subr.mxu0 0.0
    %490 = vmatpush1.msra.mxu0 0.0
    %491 = vmatprep.subr.mxu0 0.0
    %492 = vmatpush1.msra.mxu0 0.0
    %493 = vmatprep.subr.mxu0 0.0
    %494 = vmatpush1.msra.mxu0 0.0
    %495 = vmatprep.mubr.f32.mxu0 0.0
    %496 = vmatmul.mubr.f32.gmra.mrb[0].mxu0 %v429
    %v497 = vpop.f32.mrb[0].mxu0
    %v498 = vadd.f32 0.0, %v497
    %v499 = vpop.f32.mrb[0].mxu0
    %500 = vdwg.mxu0
    %v501 = vadd.f32 %v245, %v498
    %v502 = vtanh.pop %v501
    %v504 = vsel %vm277, %v502, 0
    %506 = vmatprep.subr.mxu0 0.0
    %507 = vmatpush1.msra.mxu0 %v273
    %508 = vmatprep.subr.mxu0 0.0
    %509 = vmatpush1.msra.mxu0 %v274
    %510 = vmatprep.subr.mxu0 0.0
    %511 = vmatpush1.msra.mxu0 %v275
    %512 = vmatprep.subr.mxu0 0.0
    %513 = vmatpush1.msra.mxu0 %v276
    %514 = vmatprep.subr.mxu0 0.0
    %515 = vmatpush1.msra.mxu0 0.0
    %516 = vmatprep.subr.mxu0 0.0
    %517 = vmatpush1.msra.mxu0 0.0
    %518 = vmatprep.subr.mxu0 0.0
    %519 = vmatpush1.msra.mxu0 0.0
    %520 = vmatprep.subr.mxu0 0.0
    %521 = vmatpush1.msra.mxu0 0.0
    %522 = vmatprep.subr.mxu0 0.0
    %523 = vmatpush1.msra.mxu0 0.0
    %524 = vmatprep.subr.mxu0 0.0
    %525 = vmatpush1.msra.mxu0 0.0
    %526 = vmatprep.subr.mxu0 0.0
    %527 = vmatpush1.msra.mxu0 0.0
    %528 = vmatprep.subr.mxu0 0.0
    %529 = vmatpush1.msra.mxu0 0.0
    %530 = vmatprep.subr.mxu0 0.0
    %531 = vmatpush1.msra.mxu0 0.0
    %532 = vmatprep.subr.mxu0 0.0
    %533 = vmatpush1.msra.mxu0 0.0
    %534 = vmatprep.subr.mxu0 0.0
    %535 = vmatpush1.msra.mxu0 0.0
    %536 = vmatprep.subr.mxu0 0.0
    %537 = vmatpush1.msra.mxu0 0.0
    %538 = vmatprep.subr.mxu0 0.0
    %539 = vmatpush1.msra.mxu0 0.0
    %540 = vmatprep.subr.mxu0 0.0
    %541 = vmatpush1.msra.mxu0 0.0
    %542 = vmatprep.subr.mxu0 0.0
    %543 = vmatpush1.msra.mxu0 0.0
    %544 = vmatprep.subr.mxu0 0.0
    %545 = vmatpush1.msra.mxu0 0.0
    %546 = vmatprep.subr.mxu0 0.0
    %547 = vmatpush1.msra.mxu0 0.0
    %548 = vmatprep.subr.mxu0 0.0
    %549 = vmatpush1.msra.mxu0 0.0
    %550 = vmatprep.subr.mxu0 0.0
    %551 = vmatpush1.msra.mxu0 0.0
    %552 = vmatprep.subr.mxu0 0.0
    %553 = vmatpush1.msra.mxu0 0.0
    %554 = vmatprep.subr.mxu0 0.0
    %555 = vmatpush1.msra.mxu0 0.0
    %556 = vmatprep.subr.mxu0 0.0
    %557 = vmatpush1.msra.mxu0 0.0
    %558 = vmatprep.subr.mxu0 0.0
    %559 = vmatpush1.msra.mxu0 0.0
    %560 = vmatprep.subr.mxu0 0.0
    %561 = vmatpush1.msra.mxu0 0.0
    %562 = vmatprep.subr.mxu0 0.0
    %563 = vmatpush1.msra.mxu0 0.0
    %564 = vmatprep.subr.mxu0 0.0
    %565 = vmatpush1.msra.mxu0 0.0
    %566 = vmatprep.subr.mxu0 0.0
    %567 = vmatpush1.msra.mxu0 0.0
    %568 = vmatprep.subr.mxu0 0.0
    %569 = vmatpush1.msra.mxu0 0.0
    %570 = vmatprep.mubr.f32.mxu0 0.0
    %571 = vmatmul.mubr.f32.gmra.mrb[0].mxu0 %v504
    %v572 = vpop.f32.mrb[0].mxu0
    %v573 = vadd.f32 0.0, %v572
    %v574 = vpop.f32.mrb[0].mxu0
    %575 = vdwg.mxu0
    %v576 = vadd.f32 %v247, %v573
    %v577 = vtanh.pop %v576
    %v579 = vsel %vm277, %v577, 0
    %581 = vmatprep.subr.mxu0 0.0
    %582 = vmatpush1.msra.mxu0 %v273
    %583 = vmatprep.subr.mxu0 0.0
    %584 = vmatpush1.msra.mxu0 %v274
    %585 = vmatprep.subr.mxu0 0.0
    %586 = vmatpush1.msra.mxu0 %v275
    %587 = vmatprep.subr.mxu0 0.0
    %588 = vmatpush1.msra.mxu0 %v276
    %589 = vmatprep.subr.mxu0 0.0
    %590 = vmatpush1.msra.mxu0 0.0
    %591 = vmatprep.subr.mxu0 0.0
    %592 = vmatpush1.msra.mxu0 0.0
    %593 = vmatprep.subr.mxu0 0.0
    %594 = vmatpush1.msra.mxu0 0.0
    %595 = vmatprep.subr.mxu0 0.0
    %596 = vmatpush1.msra.mxu0 0.0
    %597 = vmatprep.subr.mxu0 0.0
    %598 = vmatpush1.msra.mxu0 0.0
    %599 = vmatprep.subr.mxu0 0.0
    %600 = vmatpush1.msra.mxu0 0.0
    %601 = vmatprep.subr.mxu0 0.0
    %602 = vmatpush1.msra.mxu0 0.0
    %603 = vmatprep.subr.mxu0 0.0
    %604 = vmatpush1.msra.mxu0 0.0
    %605 = vmatprep.subr.mxu0 0.0
    %606 = vmatpush1.msra.mxu0 0.0
    %607 = vmatprep.subr.mxu0 0.0
    %608 = vmatpush1.msra.mxu0 0.0
    %609 = vmatprep.subr.mxu0 0.0
    %610 = vmatpush1.msra.mxu0 0.0
    %611 = vmatprep.subr.mxu0 0.0
    %612 = vmatpush1.msra.mxu0 0.0
    %613 = vmatprep.subr.mxu0 0.0
    %614 = vmatpush1.msra.mxu0 0.0
    %615 = vmatprep.subr.mxu0 0.0
    %616 = vmatpush1.msra.mxu0 0.0
    %617 = vmatprep.subr.mxu0 0.0
    %618 = vmatpush1.msra.mxu0 0.0
    %619 = vmatprep.subr.mxu0 0.0
    %620 = vmatpush1.msra.mxu0 0.0
    %621 = vmatprep.subr.mxu0 0.0
    %622 = vmatpush1.msra.mxu0 0.0
    %623 = vmatprep.subr.mxu0 0.0
    %624 = vmatpush1.msra.mxu0 0.0
    %625 = vmatprep.subr.mxu0 0.0
    %626 = vmatpush1.msra.mxu0 0.0
    %627 = vmatprep.subr.mxu0 0.0
    %628 = vmatpush1.msra.mxu0 0.0
    %629 = vmatprep.subr.mxu0 0.0
    %630 = vmatpush1.msra.mxu0 0.0
    %631 = vmatprep.subr.mxu0 0.0
    %632 = vmatpush1.msra.mxu0 0.0
    %633 = vmatprep.subr.mxu0 0.0
    %634 = vmatpush1.msra.mxu0 0.0
    %635 = vmatprep.subr.mxu0 0.0
    %636 = vmatpush1.msra.mxu0 0.0
    %637 = vmatprep.subr.mxu0 0.0
    %638 = vmatpush1.msra.mxu0 0.0
    %639 = vmatprep.subr.mxu0 0.0
    %640 = vmatpush1.msra.mxu0 0.0
    %641 = vmatprep.subr.mxu0 0.0
    %642 = vmatpush1.msra.mxu0 0.0
    %643 = vmatprep.subr.mxu0 0.0
    %644 = vmatpush1.msra.mxu0 0.0
    %645 = vmatprep.mubr.f32.mxu0 0.0
    %646 = vmatmul.mubr.f32.gmra.mrb[0].mxu0 %v579
    %v647 = vpop.f32.mrb[0].mxu0
    %v648 = vadd.f32 0.0, %v647
    %v649 = vpop.f32.mrb[0].mxu0
    %650 = vdwg.mxu0
    %v651 = vadd.f32 %v255, %v648
    %v652 = vtanh.pop %v651
    %v654 = vsel %vm277, %v652, 0
    %656 = vmatprep.subr.mxu0 0.0
    %657 = vmatpush1.msra.mxu0 %v273
    %658 = vmatprep.subr.mxu0 0.0
    %659 = vmatpush1.msra.mxu0 %v274
    %660 = vmatprep.subr.mxu0 0.0
    %661 = vmatpush1.msra.mxu0 %v275
    %662 = vmatprep.subr.mxu0 0.0
    %663 = vmatpush1.msra.mxu0 %v276
    %664 = vmatprep.subr.mxu0 0.0
    %665 = vmatpush1.msra.mxu0 0.0
    %666 = vmatprep.subr.mxu0 0.0
    %667 = vmatpush1.msra.mxu0 0.0
    %668 = vmatprep.subr.mxu0 0.0
    %669 = vmatpush1.msra.mxu0 0.0
    %670 = vmatprep.subr.mxu0 0.0
    %671 = vmatpush1.msra.mxu0 0.0
    %672 = vmatprep.subr.mxu0 0.0
    %673 = vmatpush1.msra.mxu0 0.0
    %674 = vmatprep.subr.mxu0 0.0
    %675 = vmatpush1.msra.mxu0 0.0
    %676 = vmatprep.subr.mxu0 0.0
    %677 = vmatpush1.msra.mxu0 0.0
    %678 = vmatprep.subr.mxu0 0.0
    %679 = vmatpush1.msra.mxu0 0.0
    %680 = vmatprep.subr.mxu0 0.0
    %681 = vmatpush1.msra.mxu0 0.0
    %682 = vmatprep.subr.mxu0 0.0
    %683 = vmatpush1.msra.mxu0 0.0
    %684 = vmatprep.subr.mxu0 0.0
    %685 = vmatpush1.msra.mxu0 0.0
    %686 = vmatprep.subr.mxu0 0.0
    %687 = vmatpush1.msra.mxu0 0.0
    %688 = vmatprep.subr.mxu0 0.0
    %689 = vmatpush1.msra.mxu0 0.0
    %690 = vmatprep.subr.mxu0 0.0
    %691 = vmatpush1.msra.mxu0 0.0
    %692 = vmatprep.subr.mxu0 0.0
    %693 = vmatpush1.msra.mxu0 0.0
    %694 = vmatprep.subr.mxu0 0.0
    %695 = vmatpush1.msra.mxu0 0.0
    %696 = vmatprep.subr.mxu0 0.0
    %697 = vmatpush1.msra.mxu0 0.0
    %698 = vmatprep.subr.mxu0 0.0
    %699 = vmatpush1.msra.mxu0 0.0
    %700 = vmatprep.subr.mxu0 0.0
    %701 = vmatpush1.msra.mxu0 0.0
    %702 = vmatprep.subr.mxu0 0.0
    %703 = vmatpush1.msra.mxu0 0.0
    %704 = vmatprep.subr.mxu0 0.0
    %705 = vmatpush1.msra.mxu0 0.0
    %706 = vmatprep.subr.mxu0 0.0
    %707 = vmatpush1.msra.mxu0 0.0
    %708 = vmatprep.subr.mxu0 0.0
    %709 = vmatpush1.msra.mxu0 0.0
    %710 = vmatprep.subr.mxu0 0.0
    %711 = vmatpush1.msra.mxu0 0.0
    %712 = vmatprep.subr.mxu0 0.0
    %713 = vmatpush1.msra.mxu0 0.0
    %714 = vmatprep.subr.mxu0 0.0
    %715 = vmatpush1.msra.mxu0 0.0
    %716 = vmatprep.subr.mxu0 0.0
    %717 = vmatpush1.msra.mxu0 0.0
    %718 = vmatprep.subr.mxu0 0.0
    %719 = vmatpush1.msra.mxu0 0.0
    %720 = vmatprep.mubr.f32.mxu0 0.0
    %721 = vmatmul.mubr.f32.gmra.mrb[0].mxu0 %v654
    %v722 = vpop.f32.mrb[0].mxu0
    %v723 = vadd.f32 0.0, %v722
    %v724 = vpop.f32.mrb[0].mxu0
    %725 = vdwg.mxu0
    %v726 = vadd.f32 %v263, %v723
    %v727 = vtanh.pop %v726
    %v729 = vsel %vm277, %v727, 0
    %731 = vmatprep.subr.mxu0 0.0
    %732 = vmatpush1.msra.mxu0 %v273
    %733 = vmatprep.subr.mxu0 0.0
    %734 = vmatpush1.msra.mxu0 %v274
    %735 = vmatprep.subr.mxu0 0.0
    %736 = vmatpush1.msra.mxu0 %v275
    %737 = vmatprep.subr.mxu0 0.0
    %738 = vmatpush1.msra.mxu0 %v276
    %739 = vmatprep.subr.mxu0 0.0
    %740 = vmatpush1.msra.mxu0 0.0
    %741 = vmatprep.subr.mxu0 0.0
    %742 = vmatpush1.msra.mxu0 0.0
    %743 = vmatprep.subr.mxu0 0.0
    %744 = vmatpush1.msra.mxu0 0.0
    %745 = vmatprep.subr.mxu0 0.0
    %746 = vmatpush1.msra.mxu0 0.0
    %747 = vmatprep.subr.mxu0 0.0
    %748 = vmatpush1.msra.mxu0 0.0
    %749 = vmatprep.subr.mxu0 0.0
    %750 = vmatpush1.msra.mxu0 0.0
    %751 = vmatprep.subr.mxu0 0.0
    %752 = vmatpush1.msra.mxu0 0.0
    %753 = vmatprep.subr.mxu0 0.0
    %754 = vmatpush1.msra.mxu0 0.0
    %755 = vmatprep.subr.mxu0 0.0
    %756 = vmatpush1.msra.mxu0 0.0
    %757 = vmatprep.subr.mxu0 0.0
    %758 = vmatpush1.msra.mxu0 0.0
    %759 = vmatprep.subr.mxu0 0.0
    %760 = vmatpush1.msra.mxu0 0.0
    %761 = vmatprep.subr.mxu0 0.0
    %762 = vmatpush1.msra.mxu0 0.0
    %763 = vmatprep.subr.mxu0 0.0
    %764 = vmatpush1.msra.mxu0 0.0
    %765 = vmatprep.subr.mxu0 0.0
    %766 = vmatpush1.msra.mxu0 0.0
    %767 = vmatprep.subr.mxu0 0.0
    %768 = vmatpush1.msra.mxu0 0.0
    %769 = vmatprep.subr.mxu0 0.0
    %770 = vmatpush1.msra.mxu0 0.0
    %771 = vmatprep.subr.mxu0 0.0
    %772 = vmatpush1.msra.mxu0 0.0
    %773 = vmatprep.subr.mxu0 0.0
    %774 = vmatpush1.msra.mxu0 0.0
    %775 = vmatprep.subr.mxu0 0.0
    %776 = vmatpush1.msra.mxu0 0.0
    %777 = vmatprep.subr.mxu0 0.0
    %778 = vmatpush1.msra.mxu0 0.0
    %779 = vmatprep.subr.mxu0 0.0
    %780 = vmatpush1.msra.mxu0 0.0
    %781 = vmatprep.subr.mxu0 0.0
    %782 = vmatpush1.msra.mxu0 0.0
    %783 = vmatprep.subr.mxu0 0.0
    %784 = vmatpush1.msra.mxu0 0.0
    %785 = vmatprep.subr.mxu0 0.0
    %786 = vmatpush1.msra.mxu0 0.0
    %787 = vmatprep.subr.mxu0 0.0
    %788 = vmatpush1.msra.mxu0 0.0
    %789 = vmatprep.subr.mxu0 0.0
    %790 = vmatpush1.msra.mxu0 0.0
    %791 = vmatprep.subr.mxu0 0.0
    %792 = vmatpush1.msra.mxu0 0.0
    %793 = vmatprep.subr.mxu0 0.0
    %794 = vmatpush1.msra.mxu0 0.0
    %795 = vmatprep.mubr.f32.mxu0 0.0
    %796 = vmatmul.mubr.f32.gmra.mrb[0].mxu0 %v729
    %v797 = vpop.f32.mrb[0].mxu0
    %v798 = vadd.f32 0.0, %v797
    %v799 = vpop.f32.mrb[0].mxu0
    %800 = vdwg.mxu0
    %v801 = vadd.f32 %v262, %v798
    %v802 = vtanh.pop %v801
    %v804 = vsel %vm277, %v802, 0
    %806 = vmatprep.subr.mxu0 0.0
    %807 = vmatpush1.msra.mxu0 %v273
    %808 = vmatprep.subr.mxu0 0.0
    %809 = vmatpush1.msra.mxu0 %v274
    %810 = vmatprep.subr.mxu0 0.0
    %811 = vmatpush1.msra.mxu0 %v275
    %812 = vmatprep.subr.mxu0 0.0
    %813 = vmatpush1.msra.mxu0 %v276
    %814 = vmatprep.subr.mxu0 0.0
    %815 = vmatpush1.msra.mxu0 0.0
    %816 = vmatprep.subr.mxu0 0.0
    %817 = vmatpush1.msra.mxu0 0.0
    %818 = vmatprep.subr.mxu0 0.0
    %819 = vmatpush1.msra.mxu0 0.0
    %820 = vmatprep.subr.mxu0 0.0
    %821 = vmatpush1.msra.mxu0 0.0
    %822 = vmatprep.subr.mxu0 0.0
    %823 = vmatpush1.msra.mxu0 0.0
    %824 = vmatprep.subr.mxu0 0.0
    %825 = vmatpush1.msra.mxu0 0.0
    %826 = vmatprep.subr.mxu0 0.0
    %827 = vmatpush1.msra.mxu0 0.0
    %828 = vmatprep.subr.mxu0 0.0
    %829 = vmatpush1.msra.mxu0 0.0
    %830 = vmatprep.subr.mxu0 0.0
    %831 = vmatpush1.msra.mxu0 0.0
    %832 = vmatprep.subr.mxu0 0.0
    %833 = vmatpush1.msra.mxu0 0.0
    %834 = vmatprep.subr.mxu0 0.0
    %835 = vmatpush1.msra.mxu0 0.0
    %836 = vmatprep.subr.mxu0 0.0
    %837 = vmatpush1.msra.mxu0 0.0
    %838 = vmatprep.subr.mxu0 0.0
    %839 = vmatpush1.msra.mxu0 0.0
    %840 = vmatprep.subr.mxu0 0.0
    %841 = vmatpush1.msra.mxu0 0.0
    %842 = vmatprep.subr.mxu0 0.0
    %843 = vmatpush1.msra.mxu0 0.0
    %844 = vmatprep.subr.mxu0 0.0
    %845 = vmatpush1.msra.mxu0 0.0
    %846 = vmatprep.subr.mxu0 0.0
    %847 = vmatpush1.msra.mxu0 0.0
    %848 = vmatprep.subr.mxu0 0.0
    %849 = vmatpush1.msra.mxu0 0.0
    %850 = vmatprep.subr.mxu0 0.0
    %851 = vmatpush1.msra.mxu0 0.0
    %852 = vmatprep.subr.mxu0 0.0
    %853 = vmatpush1.msra.mxu0 0.0
    %854 = vmatprep.subr.mxu0 0.0
    %855 = vmatpush1.msra.mxu0 0.0
    %856 = vmatprep.subr.mxu0 0.0
    %857 = vmatpush1.msra.mxu0 0.0
    %858 = vmatprep.subr.mxu0 0.0
    %859 = vmatpush1.msra.mxu0 0.0
    %860 = vmatprep.subr.mxu0 0.0
    %861 = vmatpush1.msra.mxu0 0.0
    %862 = vmatprep.subr.mxu0 0.0
    %863 = vmatpush1.msra.mxu0 0.0
    %864 = vmatprep.subr.mxu0 0.0
    %865 = vmatpush1.msra.mxu0 0.0
    %866 = vmatprep.subr.mxu0 0.0
    %867 = vmatpush1.msra.mxu0 0.0
    %868 = vmatprep.subr.mxu0 0.0
    %869 = vmatpush1.msra.mxu0 0.0
    %870 = vmatprep.mubr.f32.mxu0 0.0
    %871 = vmatmul.mubr.f32.gmra.mrb[0].mxu0 %v804
    %v872 = vpop.f32.mrb[0].mxu0
    %v873 = vadd.f32 0.0, %v872
    %v874 = vpop.f32.mrb[0].mxu0
    %875 = vdwg.mxu0
    %v876 = vadd.f32 %v264, %v873
    %v877 = vtanh.pop %v876
    %v878 = vld [vmem:[%s6] sm:$0xff]
    %v879 = vld [vmem:[%s6 + $0x8] sm:$0xff]
    %v880 = vld [vmem:[%s6 + $0x10] sm:$0xff]
    %v881 = vld [vmem:[%s6 + $0x18] sm:$0xff]
    %v882 = vld [vmem:[%s7] sm:$0x1]
    %v884 = vlaneseq
    %v885 = vshrl.u32 %v884, 7
    %v886 = vsub.s32 0, %v885
    %v887 = vrot.slane %v882, %v886
    %v890 = vsel %vm277, %v877, 0
    %892 = vmatprep.subr.mxu0 0.0
    %893 = vmatpush1.msra.mxu0 %v878
    %894 = vmatprep.subr.mxu0 0.0
    %895 = vmatpush1.msra.mxu0 %v879
    %896 = vmatprep.subr.mxu0 0.0
    %897 = vmatpush1.msra.mxu0 %v880
    %898 = vmatprep.subr.mxu0 0.0
    %899 = vmatpush1.msra.mxu0 %v881
    %900 = vmatprep.subr.mxu0 0.0
    %901 = vmatpush1.msra.mxu0 0.0
    %902 = vmatprep.subr.mxu0 0.0
    %903 = vmatpush1.msra.mxu0 0.0
    %904 = vmatprep.subr.mxu0 0.0
    %905 = vmatpush1.msra.mxu0 0.0
    %906 = vmatprep.subr.mxu0 0.0
    %907 = vmatpush1.msra.mxu0 0.0
    %908 = vmatprep.subr.mxu0 0.0
    %909 = vmatpush1.msra.mxu0 0.0
    %910 = vmatprep.subr.mxu0 0.0
    %911 = vmatpush1.msra.mxu0 0.0
    %912 = vmatprep.subr.mxu0 0.0
    %913 = vmatpush1.msra.mxu0 0.0
    %914 = vmatprep.subr.mxu0 0.0
    %915 = vmatpush1.msra.mxu0 0.0
    %916 = vmatprep.subr.mxu0 0.0
    %917 = vmatpush1.msra.mxu0 0.0
    %918 = vmatprep.subr.mxu0 0.0
    %919 = vmatpush1.msra.mxu0 0.0
    %920 = vmatprep.subr.mxu0 0.0
    %921 = vmatpush1.msra.mxu0 0.0
    %922 = vmatprep.subr.mxu0 0.0
    %923 = vmatpush1.msra.mxu0 0.0
    %924 = vmatprep.subr.mxu0 0.0
    %925 = vmatpush1.msra.mxu0 0.0
    %926 = vmatprep.subr.mxu0 0.0
    %927 = vmatpush1.msra.mxu0 0.0
    %928 = vmatprep.subr.mxu0 0.0
    %929 = vmatpush1.msra.mxu0 0.0
    %930 = vmatprep.subr.mxu0 0.0
    %931 = vmatpush1.msra.mxu0 0.0
    %932 = vmatprep.subr.mxu0 0.0
    %933 = vmatpush1.msra.mxu0 0.0
    %934 = vmatprep.subr.mxu0 0.0
    %935 = vmatpush1.msra.mxu0 0.0
    %936 = vmatprep.subr.mxu0 0.0
    %937 = vmatpush1.msra.mxu0 0.0
    %938 = vmatprep.subr.mxu0 0.0
    %939 = vmatpush1.msra.mxu0 0.0
    %940 = vmatprep.subr.mxu0 0.0
    %941 = vmatpush1.msra.mxu0 0.0
    %942 = vmatprep.subr.mxu0 0.0
    %943 = vmatpush1.msra.mxu0 0.0
    %944 = vmatprep.subr.mxu0 0.0
    %945 = vmatpush1.msra.mxu0 0.0
    %946 = vmatprep.subr.mxu0 0.0
    %947 = vmatpush1.msra.mxu0 0.0
    %948 = vmatprep.subr.mxu0 0.0
    %949 = vmatpush1.msra.mxu0 0.0
    %950 = vmatprep.subr.mxu0 0.0
    %951 = vmatpush1.msra.mxu0 0.0
    %952 = vmatprep.subr.mxu0 0.0
    %953 = vmatpush1.msra.mxu0 0.0
    %954 = vmatprep.subr.mxu0 0.0
    %955 = vmatpush1.msra.mxu0 0.0
    %956 = vmatprep.mubr.f32.mxu0 0.0
    %957 = vmatmul.mubr.f32.gmra.mrb[0].mxu0 %v890
    %v958 = vpop.f32.mrb[0].mxu0
    %v959 = vadd.f32 %v887, %v958
    %v960 = vpop.f32.mrb[0].mxu0
    %961 = vdwg.mxu0
    %vm962 = vcmask 58368
    %963 = vst.msk [vmem:[#allocation2] sm:$0x3] %vm962, %v959
    // Predicated region
    $region34: #{rnn_classifier_forward.1} parent=1 // pred_check
      _
    $region35: #{rnn_classifier_forward.1} parent=1 // pred_check_branch
      %965 = sbr.rel (0) target = $region37
    $region36: #{rnn_classifier_forward.1} parent=1 // pred_region
      %s967 = ssub.s32 32, 32
      %968 = vsyncadd [#allocation3], %s967
      %s970 = sshll.u32 [#allocation2], 4
      %s971 = int_to_ptr.vmem [resolvable:$true] %s970
      %973 = dma.vmem_to_hbm [thread:$0]  %s971, 32, %s8, [#allocation3]
    $region37: #{rnn_classifier_forward.1} parent=1 // pred_fallthru
      _
    // Predicated region
    $region38: #{rnn_classifier_forward.1} parent=1 // pred_check
      _
    $region39: #{rnn_classifier_forward.1} parent=1 // pred_check_branch
      %975 = sbr.rel (0) target = $region41
    $region40: #{rnn_classifier_forward.1} parent=1 // pred_region
      %976 = dma.done [#allocation3], 32
    $region41: #{rnn_classifier_forward.1} parent=1 // pred_fallthru
      _
    %977 = vsyncpa [#allocation3], 1

</llo_original>
